<compile_context>
chip_gen: v6e
topology: v6e:2x2x1
jax: 0.10.0
libtpu: 0.0.40
codegen_flags: <defaults>
</compile_context>

<pallas_src>
import math
import functools

import jax
import jax.numpy as jnp
from jax.experimental import pallas as pl
from jax.experimental.pallas import tpu as pltpu


def _attn_kernel(*refs, head_dim, has_mask):
    if has_mask:
        q_ref, k_ref, v_ref, mask_ref, out_ref, attn_ref = refs
    else:
        q_ref, k_ref, v_ref, out_ref, attn_ref = refs
        mask_ref = None

    # Scale q (Sq*D elements) instead of the Sq*Sk energy matrix.
    scale = jnp.asarray(1.0 / math.sqrt(head_dim), dtype=q_ref.dtype)
    q = q_ref[...] * scale                # (G, TQ, D), input dtype
    k = k_ref[...]                        # (G, Sk, D), input dtype
    v = v_ref[...]                        # (G, Sk, D), input dtype

    # energy = q @ k^T per packed head; contract last dims -> no explicit k.T.
    scores = jnp.einsum(
        "gqd,gkd->gqk", q, k, preferred_element_type=jnp.float32
    )                                     # (G, TQ, Sk) f32

    if has_mask:
        m = mask_ref[...]                 # (G or 1, TQ, Sk) int8
        scores = jnp.where(m != 0, jnp.float32(-1e20), scores)

    # Numerically stable softmax along Sk.
    row_max = jnp.max(scores, axis=-1, keepdims=True)
    e = jnp.exp(scores - row_max)
    denom = jnp.sum(e, axis=-1, keepdims=True)
    # EUP approximate reciprocal + one Newton step (full f32 accuracy, off VALU).
    r = pl.reciprocal(denom, approx=True)
    r = r * (2.0 - denom * r)
    attn = e * r                          # (G, TQ, Sk) f32

    # output = attn @ v (MXU operands in value dtype, f32 accumulation).
    out = jnp.einsum(
        "gqk,gkd->gqd", attn.astype(v.dtype), v, preferred_element_type=jnp.float32
    )                                     # (G, TQ, D) f32

    out_ref[...] = out.astype(out_ref.dtype)
    attn_ref[...] = attn.astype(attn_ref.dtype)


def _choose_tiles(BH, Sq, Sk, D, in_bytes, attn_bytes, has_mask, mask_per_head):
    """Pick (G heads per step, TQ query rows per step) under a v7x-safe VMEM budget."""
    budget = 20 * 1024 * 1024  # safe under v7x 64 MiB physical / default scoped limits

    # Pack heads so the packed work is reasonably dense for small D.
    g_target = min(BH, max(1, 128 // max(D, 1))) if D < 128 else 1

    tq_cands = sorted(
        {d for d in range(8, min(Sq, 512) + 1) if Sq % d == 0 and d % 8 == 0},
        reverse=True,
    )
    if not tq_cands:
        tq_cands = [Sq]  # full-extent block is always legal

    g_cands = sorted(
        [d for d in range(1, BH + 1) if BH % d == 0 and d <= g_target],
        reverse=True,
    )
    if not g_cands:
        g_cands = [1]

    def estimate(G, TQ):
        Gm = G if mask_per_head else 1
        buf = 2  # double buffering
        qkv = buf * (G * TQ * D + 2 * G * Sk * D) * in_bytes
        outs = buf * (G * TQ * D * in_bytes + G * TQ * Sk * attn_bytes)
        maskb = buf * Gm * TQ * Sk if has_mask else 0
        scratch = 3 * G * TQ * Sk * 4  # f32 scores / exp / attn temporaries
        return qkv + outs + maskb + scratch

    for G in g_cands:
        for TQ in tq_cands:
            if estimate(G, TQ) <= budget:
                return G, TQ
    return 1, tq_cands[-1]


def scaled_dot_product_attention(key, query, value, mask, head_dim):
    """Pallas equivalent of ScaledDotProductAttention.forward.

    key, query, value: [B, H, S, D] arrays (Sq and Sk may differ).
    mask: broadcastable to [B, H, Sq, Sk]; nonzero/True => masked. May be None.
    Returns (output [B, H, Sq, D], attention_weight [B, H, Sq, Sk]).
    """
    B, H, Sq, D = query.shape
    Sk = key.shape[2]
    BH = B * H

    q = query.reshape(BH, Sq, D)
    k = key.reshape(BH, Sk, D)
    v = value.reshape(BH, Sk, D)

    has_mask = mask is not None
    mask_shared = False
    m_flat = None
    if has_mask:
        if mask.ndim < 4:
            mask = mask.reshape((1,) * (4 - mask.ndim) + mask.shape)
        Bm, Hm = mask.shape[0], mask.shape[1]
        # Broadcast only Sq/Sk here; B/H broadcasting happens in the index_map
        # when possible (avoids materializing a per-head mask in HBM).
        mask4 = jnp.broadcast_to(mask, (Bm, Hm, Sq, Sk))
        mask_shared = (Bm == 1 and Hm == 1)
        if mask_shared:
            m_flat = mask4.reshape(1, Sq, Sk).astype(jnp.int8)
        else:
            m_flat = (
                jnp.broadcast_to(mask4, (B, H, Sq, Sk))
                .reshape(BH, Sq, Sk)
                .astype(jnp.int8)
            )

    in_bytes = query.dtype.itemsize
    attn_dtype = query.dtype
    G, TQ = _choose_tiles(
        BH, Sq, Sk, D, in_bytes, jnp.dtype(attn_dtype).itemsize,
        has_mask, has_mask and not mask_shared,
    )
    grid = (BH // G, Sq // TQ)

    in_specs = [
        pl.BlockSpec((G, TQ, D), lambda h, qi: (h, qi, 0)),   # query tile
        pl.BlockSpec((G, Sk, D), lambda h, qi: (h, 0, 0)),    # key (resident over q tiles)
        pl.BlockSpec((G, Sk, D), lambda h, qi: (h, 0, 0)),    # value (resident over q tiles)
    ]
    inputs = [q, k, v]
    if has_mask:
        if mask_shared:
            in_specs.append(pl.BlockSpec((1, TQ, Sk), lambda h, qi: (0, qi, 0)))
        else:
            in_specs.append(pl.BlockSpec((G, TQ, Sk), lambda h, qi: (h, qi, 0)))
        inputs.append(m_flat)

    out_specs = [
        pl.BlockSpec((G, TQ, D), lambda h, qi: (h, qi, 0)),
        pl.BlockSpec((G, TQ, Sk), lambda h, qi: (h, qi, 0)),
    ]
    out_shape = (
        jax.ShapeDtypeStruct((BH, Sq, D), query.dtype),
        jax.ShapeDtypeStruct((BH, Sq, Sk), attn_dtype),
    )

    kernel = functools.partial(_attn_kernel, head_dim=head_dim, has_mask=has_mask)

    out, attn = pl.pallas_call(
        kernel,
        out_shape=out_shape,
        grid_spec=pltpu.PrefetchScalarGridSpec(
            num_scalar_prefetch=0,
            grid=grid,
            in_specs=in_specs,
            out_specs=out_specs,
        ),
        compiler_params=pltpu.CompilerParams(
            dimension_semantics=("parallel", "parallel"),
            vmem_limit_bytes=48 * 1024 * 1024,
        ),
    )(*inputs)

    return out.reshape(B, H, Sq, D), attn.reshape(B, H, Sq, Sk)


def _reference(key, query, value, mask, head_dim):
    energy = jnp.einsum("bhqd,bhkd->bhqk", query, key).astype(jnp.float32)
    if mask is not None:
        energy = jnp.where(mask, jnp.float32(-1e20), energy)
    attn = jax.nn.softmax(energy / math.sqrt(head_dim), axis=-1)
    out = jnp.einsum("bhqk,bhkd->bhqd", attn, value.astype(jnp.float32))
    return out.astype(query.dtype), attn.astype(query.dtype)


if __name__ == "__main__":
    B, H, S, D = 2, 2, 8, 32  # head_dim = 32
    k0, k1, k2, k3 = jax.random.split(jax.random.PRNGKey(0), 4)

    query = jax.random.normal(k0, (B, H, S, D), dtype=jnp.float32)
    key = jax.random.normal(k1, (B, H, S, D), dtype=jnp.float32)
    value = jax.random.normal(k2, (B, H, S, D), dtype=jnp.float32)
    mask = jax.random.bernoulli(k3, p=0.25, shape=(B, H, S, S))  # True => masked

    # 1) full per-head mask
    out, attn = scaled_dot_product_attention(key, query, value, mask, head_dim=D)
    out = jax.block_until_ready(out)
    attn = jax.block_until_ready(attn)
    ref_out, ref_attn = _reference(key, query, value, mask, head_dim=D)
    assert jnp.allclose(out, ref_out, atol=1e-4, rtol=1e-4)
    assert jnp.allclose(attn, ref_attn, atol=1e-4, rtol=1e-4)

    # 2) shared (broadcast) mask [1, 1, S, S]
    shared_mask = mask[:1, :1]
    out2, attn2 = scaled_dot_product_attention(key, query, value, shared_mask, head_dim=D)
    out2 = jax.block_until_ready(out2)
    ref_out2, ref_attn2 = _reference(key, query, value, shared_mask, head_dim=D)
    assert jnp.allclose(out2, ref_out2, atol=1e-4, rtol=1e-4)
    assert jnp.allclose(attn2, ref_attn2, atol=1e-4, rtol=1e-4)

    # 3) no mask
    out3, attn3 = scaled_dot_product_attention(key, query, value, None, head_dim=D)
    out3 = jax.block_until_ready(out3)
    ref_out3, ref_attn3 = _reference(key, query, value, None, head_dim=D)
    assert jnp.allclose(out3, ref_out3, atol=1e-4, rtol=1e-4)
    assert jnp.allclose(attn3, ref_attn3, atol=1e-4, rtol=1e-4)

    print("KERNEL_OK")
</pallas_src>

<mosaic_0001>
module attributes {stable_mosaic.version = 11 : i64} {
  func.func @_attn_kernel(%arg0: i32, %arg1: i32, %arg2: memref<4x8x32xf32, #tpu.memory_space<vmem>>, %arg3: memref<4x8x32xf32, #tpu.memory_space<vmem>>, %arg4: memref<4x8x32xf32, #tpu.memory_space<vmem>>, %arg5: memref<4x8x8xi8, #tpu.memory_space<vmem>>, %arg6: memref<4x8x32xf32, #tpu.memory_space<vmem>>, %arg7: memref<4x8x8xf32, #tpu.memory_space<vmem>>) attributes {dimension_semantics = [#tpu.dimension_semantics<parallel>, #tpu.dimension_semantics<parallel>], iteration_bounds = array<i64: 1, 1>, scalar_prefetch = 0 : i64, scratch_operands = 0 : i64, tpu.core_type = #tpu.core_type<tc>, window_params = [{transform_indices = @transform_0, window_bounds = array<i64: 4, 8, 32>}, {transform_indices = @transform_1, window_bounds = array<i64: 4, 8, 32>}, {transform_indices = @transform_2, window_bounds = array<i64: 4, 8, 32>}, {transform_indices = @transform_3, window_bounds = array<i64: 4, 8, 8>}, {transform_indices = @transform_4, window_bounds = array<i64: 4, 8, 32>}, {transform_indices = @transform_5, window_bounds = array<i64: 4, 8, 8>}]} {
    %c0 = arith.constant 0 : index
    %c0_0 = arith.constant 0 : index
    %c0_1 = arith.constant 0 : index
    %0 = vector.load %arg2[%c0, %c0_0, %c0_1] : memref<4x8x32xf32, #tpu.memory_space<vmem>>, vector<4x8x32xf32>
    %cst = arith.constant 0.176776692 : f32
    %1 = vector.broadcast %cst : f32 to vector<4x8x32xf32>
    %2 = arith.mulf %0, %1 : vector<4x8x32xf32>
    %c0_2 = arith.constant 0 : index
    %c0_3 = arith.constant 0 : index
    %c0_4 = arith.constant 0 : index
    %3 = vector.load %arg3[%c0_2, %c0_3, %c0_4] : memref<4x8x32xf32, #tpu.memory_space<vmem>>, vector<4x8x32xf32>
    %c0_5 = arith.constant 0 : index
    %c0_6 = arith.constant 0 : index
    %c0_7 = arith.constant 0 : index
    %4 = vector.load %arg4[%c0_5, %c0_6, %c0_7] : memref<4x8x32xf32, #tpu.memory_space<vmem>>, vector<4x8x32xf32>
    "tpu.trace_start"() <{level = 10 : i32, message = "gqd,gkd->gqk"}> : () -> ()
    %cst_8 = arith.constant dense<0.000000e+00> : vector<4x8x8xf32>
    %5 = tpu.matmul %2, %3, %cst_8 {dimension_numbers = #tpu.dot_dimension_numbers<[2], [2], [1], [1], [0, 0, 0, 1, 1, 1], [0], [0]>} : vector<4x8x32xf32>, vector<4x8x32xf32>, vector<4x8x8xf32> -> vector<4x8x8xf32>
    "tpu.trace_stop"() : () -> ()
    %c0_9 = arith.constant 0 : index
    %c0_10 = arith.constant 0 : index
    %c0_11 = arith.constant 0 : index
    %6 = vector.load %arg5[%c0_9, %c0_10, %c0_11] : memref<4x8x8xi8, #tpu.memory_space<vmem>>, vector<4x8x8xi8>
    %c0_i8 = arith.constant 0 : i8
    %7 = vector.broadcast %c0_i8 : i8 to vector<4x8x8xi8>
    %8 = arith.cmpi ne, %6, %7 : vector<4x8x8xi8>
    %cst_12 = arith.constant -1.000000e+20 : f32
    %9 = vector.broadcast %cst_12 : f32 to vector<4x8x8xf32>
    %10 = arith.select %8, %9, %5 : vector<4x8x8xi1>, vector<4x8x8xf32>
    %cst_13 = arith.constant dense<0xFF800000> : vector<4x8xf32>
    %11 = vector.multi_reduction <maximumf>, %10, %cst_13 [2] : vector<4x8x8xf32> to vector<4x8xf32>
    %12 = vector.shape_cast %11 : vector<4x8xf32> to vector<4x8x1xf32>
    %13 = vector.broadcast %12 : vector<4x8x1xf32> to vector<4x8x8xf32>
    %14 = arith.subf %10, %13 : vector<4x8x8xf32>
    %15 = math.exp %14 : vector<4x8x8xf32>
    %cst_14 = arith.constant dense<0.000000e+00> : vector<4x8xf32>
    %16 = vector.multi_reduction <add>, %15, %cst_14 [2] : vector<4x8x8xf32> to vector<4x8xf32>
    %17 = vector.shape_cast %16 : vector<4x8xf32> to vector<4x8x1xf32>
    %18 = tpu.reciprocal %17 {approx = true} : vector<4x8x1xf32> -> vector<4x8x1xf32>
    %19 = arith.mulf %17, %18 : vector<4x8x1xf32>
    %cst_15 = arith.constant 2.000000e+00 : f32
    %20 = vector.broadcast %cst_15 : f32 to vector<4x8x1xf32>
    %21 = arith.subf %20, %19 : vector<4x8x1xf32>
    %22 = arith.mulf %18, %21 : vector<4x8x1xf32>
    %23 = vector.broadcast %22 : vector<4x8x1xf32> to vector<4x8x8xf32>
    %24 = arith.mulf %15, %23 : vector<4x8x8xf32>
    "tpu.trace_start"() <{level = 10 : i32, message = "gqk,gkd->gqd"}> : () -> ()
    %cst_16 = arith.constant dense<0.000000e+00> : vector<4x8x32xf32>
    %25 = tpu.matmul %24, %4, %cst_16 {dimension_numbers = #tpu.dot_dimension_numbers<[2], [1], [1], [2], [0, 0, 0, 1, 1, 2], [0], [0]>} : vector<4x8x8xf32>, vector<4x8x32xf32>, vector<4x8x32xf32> -> vector<4x8x32xf32>
    "tpu.trace_stop"() : () -> ()
    %c0_17 = arith.constant 0 : index
    %c0_18 = arith.constant 0 : index
    %c0_19 = arith.constant 0 : index
    %26 = vector.load %arg6[%c0_17, %c0_18, %c0_19] : memref<4x8x32xf32, #tpu.memory_space<vmem>>, vector<4x8x32xf32>
    tpu.vector_store %arg6[%c0_17, %c0_18, %c0_19], %25 {strides = array<i32>} : memref<4x8x32xf32, #tpu.memory_space<vmem>>, vector<4x8x32xf32>,
    %c0_20 = arith.constant 0 : index
    %c0_21 = arith.constant 0 : index
    %c0_22 = arith.constant 0 : index
    %27 = vector.load %arg7[%c0_20, %c0_21, %c0_22] : memref<4x8x8xf32, #tpu.memory_space<vmem>>, vector<4x8x8xf32>
    tpu.vector_store %arg7[%c0_20, %c0_21, %c0_22], %24 {strides = array<i32>} : memref<4x8x8xf32, #tpu.memory_space<vmem>>, vector<4x8x8xf32>,
    return
  }
  func.func @transform_0(%arg0: i32, %arg1: i32) -> (i32, i32, i32) {
    %c0_i32 = arith.constant 0 : i32
    %c0_i32_0 = arith.constant 0 : i32
    return %arg0, %arg1, %c0_i32 : i32, i32, i32
  }
  func.func @transform_1(%arg0: i32, %arg1: i32) -> (i32, i32, i32) {
    %c0_i32 = arith.constant 0 : i32
    %c0_i32_0 = arith.constant 0 : i32
    %c0_i32_1 = arith.constant 0 : i32
    return %arg0, %c0_i32, %c0_i32_0 : i32, i32, i32
  }
  func.func @transform_2(%arg0: i32, %arg1: i32) -> (i32, i32, i32) {
    %c0_i32 = arith.constant 0 : i32
    %c0_i32_0 = arith.constant 0 : i32
    %c0_i32_1 = arith.constant 0 : i32
    return %arg0, %c0_i32, %c0_i32_0 : i32, i32, i32
  }
  func.func @transform_3(%arg0: i32, %arg1: i32) -> (i32, i32, i32) {
    %c0_i32 = arith.constant 0 : i32
    %c0_i32_0 = arith.constant 0 : i32
    return %arg0, %arg1, %c0_i32 : i32, i32, i32
  }
  func.func @transform_4(%arg0: i32, %arg1: i32) -> (i32, i32, i32) {
    %c0_i32 = arith.constant 0 : i32
    %c0_i32_0 = arith.constant 0 : i32
    return %arg0, %arg1, %c0_i32 : i32, i32, i32
  }
  func.func @transform_5(%arg0: i32, %arg1: i32) -> (i32, i32, i32) {
    %c0_i32 = arith.constant 0 : i32
    %c0_i32_0 = arith.constant 0 : i32
    return %arg0, %arg1, %c0_i32 : i32, i32, i32
  }
}

</mosaic_0001>

<llo_original>
// kernel: tpu_custom_call.1
$region0: #{tpu_custom_call.1}
  #allocation0 [shape = 'u32[]', space=smem, size = 0x4, offset = 0x4, fixed_abs, tag = 'smem constant byte address 0x4 - core index']
  #allocation1 [shape = 'u32[144,128]{1,0:T(1,128)}', space=vmem, size = 0x12000, scoped, tag = 'internal scratch']
  %s0 = inlined_call_operand.hbm [shape: f32[4,8,32], index: 0, kind: input, shape index: {}]
  %s1 = inlined_call_operand.hbm [shape: f32[4,8,32], index: 1, kind: input, shape index: {}]
  %s2 = inlined_call_operand.hbm [shape: f32[4,8,32], index: 2, kind: input, shape index: {}]
  %s3 = inlined_call_operand.hbm [shape: s8[4,8,8], index: 3, kind: input, shape index: {}]
  %s4 = inlined_call_operand.hbm [shape: f32[4,8,32], index: 4, kind: output, shape index: {0}]
  %s5 = inlined_call_operand.hbm [shape: f32[4,8,8], index: 5, kind: output, shape index: {1}]
  %6 = xla_tuple %s4, %s5
  %s7 = sld [smem:[#allocation0]]
  $region50: #{tpu_custom_call.1} parent=0
    _
  %s9 = ssub.s32 1, %s7
  %s10 = scalar_select 0, %s9, %s7
  $region1: #{tpu_custom_call.1} parent=0
    #allocation2 [shape = 'u8[16384]{0}', space=vmem, size = 0x4000, scoped, tag = 'input window, operand 0, single buffered']
    #allocation3 [shape = 's32[1]{0}', space=sflag, size = 0x4, scoped, tag = 'scoped memory for tpu_custom_call.1']
    #allocation4 [shape = 's32[1]{0}', space=sflag, size = 0x4, scoped, tag = 'scoped memory for tpu_custom_call.1']
    #allocation5 [shape = 'u8[16384]{0}', space=vmem, size = 0x4000, scoped, tag = 'input window, operand 1, single buffered']
    #allocation6 [shape = 's32[1]{0}', space=sflag, size = 0x4, scoped, tag = 'scoped memory for tpu_custom_call.1']
    #allocation7 [shape = 'u8[16384]{0}', space=vmem, size = 0x4000, scoped, tag = 'input window, operand 2, single buffered']
    #allocation8 [shape = 'u8[4096]{0}', space=vmem, size = 0x1000, scoped, tag = 'input window, operand 3, single buffered']
    #allocation9 [shape = 's32[1]{0}', space=sflag, size = 0x4, scoped, tag = 'scoped memory for tpu_custom_call.1']
    #allocation10 [shape = 'u8[16384]{0}', space=vmem, size = 0x4000, scoped, tag = 'output window, operand 0, single buffered']
    #allocation11 [shape = 'u8[16384]{0}', space=vmem, size = 0x4000, scoped, tag = 'output window, operand 1, single buffered']
    #allocation12 [shape = 's32[1]{0}', space=sflag, size = 0x4, scoped, tag = 'scoped memory for tpu_custom_call.1']
    %11 = vsyncpa [#allocation3], 0
    %12 = vsyncpa [#allocation6], 0
    %13 = vsyncpa [#allocation9], 0
    %14 = vsyncpa [#allocation4], 0
    %15 = vsyncpa [#allocation12], 0
    // Predicated region
    $region2: #{tpu_custom_call.1} parent=1 // pred_check
      _
    $region3: #{tpu_custom_call.1} parent=1 // pred_check_branch
      %17 = sbr.rel (0) target = $region5
    $region4: #{tpu_custom_call.1} parent=1 // pred_region
      %s19 = ssub.s32 512, 512
      %20 = vsyncadd [#allocation3], %s19
      %s21 = sshll.u32 [#allocation2], 4
      %s22 = int_to_ptr.vmem [resolvable:$true] %s21
      %27 = dma.hbm_to_vmem [thread:$0]  %s0, 512, %s22, [#allocation3], 128, 128, 8
    $region5: #{tpu_custom_call.1} parent=1 // pred_fallthru
      _
    // Predicated region
    $region6: #{tpu_custom_call.1} parent=1 // pred_check
      _
    $region7: #{tpu_custom_call.1} parent=1 // pred_check_branch
      %29 = sbr.rel (0) target = $region9
    $region8: #{tpu_custom_call.1} parent=1 // pred_region
      %s31 = ssub.s32 512, 512
      %32 = vsyncadd [#allocation6], %s31
      %s33 = sshll.u32 [#allocation5], 4
      %s34 = int_to_ptr.vmem [resolvable:$true] %s33
      %39 = dma.hbm_to_vmem [thread:$0]  %s1, 512, %s34, [#allocation6], 128, 128, 8
    $region9: #{tpu_custom_call.1} parent=1 // pred_fallthru
      _
    // Predicated region
    $region10: #{tpu_custom_call.1} parent=1 // pred_check
      _
    $region11: #{tpu_custom_call.1} parent=1 // pred_check_branch
      %41 = sbr.rel (0) target = $region13
    $region12: #{tpu_custom_call.1} parent=1 // pred_region
      %s43 = ssub.s32 512, 512
      %44 = vsyncadd [#allocation6], %s43
      %s45 = sshll.u32 [#allocation7], 4
      %s46 = int_to_ptr.vmem [resolvable:$true] %s45
      %51 = dma.hbm_to_vmem [thread:$0]  %s2, 512, %s46, [#allocation6], 128, 128, 8
    $region13: #{tpu_custom_call.1} parent=1 // pred_fallthru
      _
    // Predicated region
    $region14: #{tpu_custom_call.1} parent=1 // pred_check
      _
    $region15: #{tpu_custom_call.1} parent=1 // pred_check_branch
      %53 = sbr.rel (0) target = $region17
    $region16: #{tpu_custom_call.1} parent=1 // pred_region
      %s55 = ssub.s32 128, 128
      %56 = vsyncadd [#allocation9], %s55
      %s57 = sshll.u32 [#allocation8], 4
      %s58 = int_to_ptr.vmem [resolvable:$true] %s57
      %63 = dma.hbm_to_vmem [thread:$0]  %s3, 128, %s58, [#allocation9], 32, 32, 2
    $region17: #{tpu_custom_call.1} parent=1 // pred_fallthru
      _
    // Predicated region
    $region18: #{tpu_custom_call.1} parent=1 // pred_check
      _
    $region19: #{tpu_custom_call.1} parent=1 // pred_check_branch
      %65 = sbr.rel (0) target = $region21
    $region20: #{tpu_custom_call.1} parent=1 // pred_region
      %66 = dma.done [#allocation3], 512
    $region21: #{tpu_custom_call.1} parent=1 // pred_fallthru
      _
    // Predicated region
    $region22: #{tpu_custom_call.1} parent=1 // pred_check
      _
    $region23: #{tpu_custom_call.1} parent=1 // pred_check_branch
      %68 = sbr.rel (0) target = $region25
    $region24: #{tpu_custom_call.1} parent=1 // pred_region
      %69 = dma.done [#allocation6], 512
    $region25: #{tpu_custom_call.1} parent=1 // pred_fallthru
      _
    // Predicated region
    $region26: #{tpu_custom_call.1} parent=1 // pred_check
      _
    $region27: #{tpu_custom_call.1} parent=1 // pred_check_branch
      %71 = sbr.rel (0) target = $region29
    $region28: #{tpu_custom_call.1} parent=1 // pred_region
      %72 = dma.done [#allocation6], 512
    $region29: #{tpu_custom_call.1} parent=1 // pred_fallthru
      _
    // Predicated region
    $region30: #{tpu_custom_call.1} parent=1 // pred_check
      _
    $region31: #{tpu_custom_call.1} parent=1 // pred_check_branch
      %74 = sbr.rel (0) target = $region33
    $region32: #{tpu_custom_call.1} parent=1 // pred_region
      %75 = dma.done [#allocation9], 128
    $region33: #{tpu_custom_call.1} parent=1 // pred_fallthru
      _
    %v78 = vld [vmem:[#allocation2] sm:$0xff]
    %v79 = vld [vmem:[#allocation2 + $0x8] sm:$0xff]
    %v80 = vld [vmem:[#allocation2 + $0x10] sm:$0xff]
    %v81 = vld [vmem:[#allocation2 + $0x18] sm:$0xff]
    %v82 = vmul.f32 %v78, 0.17677669
    %v83 = vmul.f32 %v79, 0.17677669
    %v84 = vmul.f32 %v80, 0.17677669
    %v85 = vmul.f32 %v81, 0.17677669
    %v86 = vld [vmem:[#allocation5] sm:$0xff]
    %v87 = vld [vmem:[#allocation5 + $0x8] sm:$0xff]
    %v88 = vld [vmem:[#allocation5 + $0x10] sm:$0xff]
    %v89 = vld [vmem:[#allocation5 + $0x18] sm:$0xff]
    %v90 = vld [vmem:[#allocation7] sm:$0xff]
    %v91 = vld [vmem:[#allocation7 + $0x8] sm:$0xff]
    %v92 = vld [vmem:[#allocation7 + $0x10] sm:$0xff]
    %v93 = vld [vmem:[#allocation7 + $0x18] sm:$0xff]
    %vm94 = vcmask 261120
    %v96 = vsel %vm94, %v82, 0
    %v99 = vsel %vm94, %v86, 0
    %101 = vmatprep.subr.mxu0 0.0
    %102 = vmatpush1.xpose.msra.mxu0 0.0
    %103 = vmatprep.subr.mxu0 0.0
    %104 = vmatpush1.xpose.msra.mxu0 0.0
    %105 = vmatprep.subr.mxu0 0.0
    %106 = vmatpush1.xpose.msra.mxu0 0.0
    %107 = vmatprep.subr.mxu0 0.0
    %108 = vmatpush1.xpose.msra.mxu0 0.0
    %109 = vmatprep.subr.mxu0 0.0
    %110 = vmatpush1.xpose.msra.mxu0 0.0
    %111 = vmatprep.subr.mxu0 0.0
    %112 = vmatpush1.xpose.msra.mxu0 0.0
    %113 = vmatprep.subr.mxu0 0.0
    %114 = vmatpush1.xpose.msra.mxu0 0.0
    %115 = vmatprep.subr.mxu0 0.0
    %116 = vmatpush1.xpose.msra.mxu0 0.0
    %117 = vmatprep.subr.mxu0 0.0
    %118 = vmatpush1.xpose.msra.mxu0 0.0
    %119 = vmatprep.subr.mxu0 0.0
    %120 = vmatpush1.xpose.msra.mxu0 0.0
    %121 = vmatprep.subr.mxu0 0.0
    %122 = vmatpush1.xpose.msra.mxu0 0.0
    %123 = vmatprep.subr.mxu0 0.0
    %124 = vmatpush1.xpose.msra.mxu0 0.0
    %125 = vmatprep.subr.mxu0 0.0
    %126 = vmatpush1.xpose.msra.mxu0 0.0
    %127 = vmatprep.subr.mxu0 0.0
    %128 = vmatpush1.xpose.msra.mxu0 0.0
    %129 = vmatprep.subr.mxu0 0.0
    %130 = vmatpush1.xpose.msra.mxu0 0.0
    %131 = vmatprep.subr.mxu0 0.0
    %132 = vmatpush1.xpose.msra.mxu0 %v99
    %133 = vmatprep.subr.mxu0 0.0
    %134 = vmatpush2.xpose.msra.mxu0 0.0
    %135 = vmatprep.subr.mxu0 0.0
    %136 = vmatpush2.xpose.msra.mxu0 0.0
    %137 = vmatprep.subr.mxu0 0.0
    %138 = vmatpush2.xpose.msra.mxu0 0.0
    %139 = vmatprep.subr.mxu0 0.0
    %140 = vmatpush2.xpose.msra.mxu0 0.0
    %141 = vmatprep.subr.mxu0 0.0
    %142 = vmatpush2.xpose.msra.mxu0 0.0
    %143 = vmatprep.subr.mxu0 0.0
    %144 = vmatpush2.xpose.msra.mxu0 0.0
    %145 = vmatprep.subr.mxu0 0.0
    %146 = vmatpush2.xpose.msra.mxu0 0.0
    %147 = vmatprep.subr.mxu0 0.0
    %148 = vmatpush2.xpose.msra.mxu0 0.0
    %149 = vmatprep.subr.mxu0 0.0
    %150 = vmatpush2.xpose.msra.mxu0 0.0
    %151 = vmatprep.subr.mxu0 0.0
    %152 = vmatpush2.xpose.msra.mxu0 0.0
    %153 = vmatprep.subr.mxu0 0.0
    %154 = vmatpush2.xpose.msra.mxu0 0.0
    %155 = vmatprep.subr.mxu0 0.0
    %156 = vmatpush2.xpose.msra.mxu0 0.0
    %157 = vmatprep.subr.mxu0 0.0
    %158 = vmatpush2.xpose.msra.mxu0 0.0
    %159 = vmatprep.subr.mxu0 0.0
    %160 = vmatpush2.xpose.msra.mxu0 0.0
    %161 = vmatprep.subr.mxu0 0.0
    %162 = vmatpush2.xpose.msra.mxu0 0.0
    %163 = vmatprep.subr.mxu0 0.0
    %164 = vmatpush2.xpose.msra.mxu0 0.0
    %165 = vmatprep.mubr.f32.mxu0 0.0
    %166 = vmatmul.mubr.f32.gmra.mxu0 %v96
    %v167 = vpop.f32.mrf.mxu0
    %v168 = vadd.f32 0.0, %v167
    %v169 = vpop.f32.mrf.mxu0
    %170 = vdwg.mxu0
    %v172 = vsel %vm94, %v83, 0
    %v175 = vsel %vm94, %v87, 0
    %177 = vmatprep.subr.mxu0 0.0
    %178 = vmatpush1.xpose.msra.mxu0 0.0
    %179 = vmatprep.subr.mxu0 0.0
    %180 = vmatpush1.xpose.msra.mxu0 0.0
    %181 = vmatprep.subr.mxu0 0.0
    %182 = vmatpush1.xpose.msra.mxu0 0.0
    %183 = vmatprep.subr.mxu0 0.0
    %184 = vmatpush1.xpose.msra.mxu0 0.0
    %185 = vmatprep.subr.mxu0 0.0
    %186 = vmatpush1.xpose.msra.mxu0 0.0
    %187 = vmatprep.subr.mxu0 0.0
    %188 = vmatpush1.xpose.msra.mxu0 0.0
    %189 = vmatprep.subr.mxu0 0.0
    %190 = vmatpush1.xpose.msra.mxu0 0.0
    %191 = vmatprep.subr.mxu0 0.0
    %192 = vmatpush1.xpose.msra.mxu0 0.0
    %193 = vmatprep.subr.mxu0 0.0
    %194 = vmatpush1.xpose.msra.mxu0 0.0
    %195 = vmatprep.subr.mxu0 0.0
    %196 = vmatpush1.xpose.msra.mxu0 0.0
    %197 = vmatprep.subr.mxu0 0.0
    %198 = vmatpush1.xpose.msra.mxu0 0.0
    %199 = vmatprep.subr.mxu0 0.0
    %200 = vmatpush1.xpose.msra.mxu0 0.0
    %201 = vmatprep.subr.mxu0 0.0
    %202 = vmatpush1.xpose.msra.mxu0 0.0
    %203 = vmatprep.subr.mxu0 0.0
    %204 = vmatpush1.xpose.msra.mxu0 0.0
    %205 = vmatprep.subr.mxu0 0.0
    %206 = vmatpush1.xpose.msra.mxu0 0.0
    %207 = vmatprep.subr.mxu0 0.0
    %208 = vmatpush1.xpose.msra.mxu0 %v175
    %209 = vmatprep.subr.mxu0 0.0
    %210 = vmatpush2.xpose.msra.mxu0 0.0
    %211 = vmatprep.subr.mxu0 0.0
    %212 = vmatpush2.xpose.msra.mxu0 0.0
    %213 = vmatprep.subr.mxu0 0.0
    %214 = vmatpush2.xpose.msra.mxu0 0.0
    %215 = vmatprep.subr.mxu0 0.0
    %216 = vmatpush2.xpose.msra.mxu0 0.0
    %217 = vmatprep.subr.mxu0 0.0
    %218 = vmatpush2.xpose.msra.mxu0 0.0
    %219 = vmatprep.subr.mxu0 0.0
    %220 = vmatpush2.xpose.msra.mxu0 0.0
    %221 = vmatprep.subr.mxu0 0.0
    %222 = vmatpush2.xpose.msra.mxu0 0.0
    %223 = vmatprep.subr.mxu0 0.0
    %224 = vmatpush2.xpose.msra.mxu0 0.0
    %225 = vmatprep.subr.mxu0 0.0
    %226 = vmatpush2.xpose.msra.mxu0 0.0
    %227 = vmatprep.subr.mxu0 0.0
    %228 = vmatpush2.xpose.msra.mxu0 0.0
    %229 = vmatprep.subr.mxu0 0.0
    %230 = vmatpush2.xpose.msra.mxu0 0.0
    %231 = vmatprep.subr.mxu0 0.0
    %232 = vmatpush2.xpose.msra.mxu0 0.0
    %233 = vmatprep.subr.mxu0 0.0
    %234 = vmatpush2.xpose.msra.mxu0 0.0
    %235 = vmatprep.subr.mxu0 0.0
    %236 = vmatpush2.xpose.msra.mxu0 0.0
    %237 = vmatprep.subr.mxu0 0.0
    %238 = vmatpush2.xpose.msra.mxu0 0.0
    %239 = vmatprep.subr.mxu0 0.0
    %240 = vmatpush2.xpose.msra.mxu0 0.0
    %241 = vmatprep.mubr.f32.mxu0 0.0
    %242 = vmatmul.mubr.f32.gmra.mxu0 %v172
    %v243 = vpop.f32.mrf.mxu0
    %v244 = vadd.f32 0.0, %v243
    %v245 = vpop.f32.mrf.mxu0
    %246 = vdwg.mxu0
    %v248 = vsel %vm94, %v84, 0
    %v251 = vsel %vm94, %v88, 0
    %253 = vmatprep.subr.mxu0 0.0
    %254 = vmatpush1.xpose.msra.mxu0 0.0
    %255 = vmatprep.subr.mxu0 0.0
    %256 = vmatpush1.xpose.msra.mxu0 0.0
    %257 = vmatprep.subr.mxu0 0.0
    %258 = vmatpush1.xpose.msra.mxu0 0.0
    %259 = vmatprep.subr.mxu0 0.0
    %260 = vmatpush1.xpose.msra.mxu0 0.0
    %261 = vmatprep.subr.mxu0 0.0
    %262 = vmatpush1.xpose.msra.mxu0 0.0
    %263 = vmatprep.subr.mxu0 0.0
    %264 = vmatpush1.xpose.msra.mxu0 0.0
    %265 = vmatprep.subr.mxu0 0.0
    %266 = vmatpush1.xpose.msra.mxu0 0.0
    %267 = vmatprep.subr.mxu0 0.0
    %268 = vmatpush1.xpose.msra.mxu0 0.0
    %269 = vmatprep.subr.mxu0 0.0
    %270 = vmatpush1.xpose.msra.mxu0 0.0
    %271 = vmatprep.subr.mxu0 0.0
    %272 = vmatpush1.xpose.msra.mxu0 0.0
    %273 = vmatprep.subr.mxu0 0.0
    %274 = vmatpush1.xpose.msra.mxu0 0.0
    %275 = vmatprep.subr.mxu0 0.0
    %276 = vmatpush1.xpose.msra.mxu0 0.0
    %277 = vmatprep.subr.mxu0 0.0
    %278 = vmatpush1.xpose.msra.mxu0 0.0
    %279 = vmatprep.subr.mxu0 0.0
    %280 = vmatpush1.xpose.msra.mxu0 0.0
    %281 = vmatprep.subr.mxu0 0.0
    %282 = vmatpush1.xpose.msra.mxu0 0.0
    %283 = vmatprep.subr.mxu0 0.0
    %284 = vmatpush1.xpose.msra.mxu0 %v251
    %285 = vmatprep.subr.mxu0 0.0
    %286 = vmatpush2.xpose.msra.mxu0 0.0
    %287 = vmatprep.subr.mxu0 0.0
    %288 = vmatpush2.xpose.msra.mxu0 0.0
    %289 = vmatprep.subr.mxu0 0.0
    %290 = vmatpush2.xpose.msra.mxu0 0.0
    %291 = vmatprep.subr.mxu0 0.0
    %292 = vmatpush2.xpose.msra.mxu0 0.0
    %293 = vmatprep.subr.mxu0 0.0
    %294 = vmatpush2.xpose.msra.mxu0 0.0
    %295 = vmatprep.subr.mxu0 0.0
    %296 = vmatpush2.xpose.msra.mxu0 0.0
    %297 = vmatprep.subr.mxu0 0.0
    %298 = vmatpush2.xpose.msra.mxu0 0.0
    %299 = vmatprep.subr.mxu0 0.0
    %300 = vmatpush2.xpose.msra.mxu0 0.0
    %301 = vmatprep.subr.mxu0 0.0
    %302 = vmatpush2.xpose.msra.mxu0 0.0
    %303 = vmatprep.subr.mxu0 0.0
    %304 = vmatpush2.xpose.msra.mxu0 0.0
    %305 = vmatprep.subr.mxu0 0.0
    %306 = vmatpush2.xpose.msra.mxu0 0.0
    %307 = vmatprep.subr.mxu0 0.0
    %308 = vmatpush2.xpose.msra.mxu0 0.0
    %309 = vmatprep.subr.mxu0 0.0
    %310 = vmatpush2.xpose.msra.mxu0 0.0
    %311 = vmatprep.subr.mxu0 0.0
    %312 = vmatpush2.xpose.msra.mxu0 0.0
    %313 = vmatprep.subr.mxu0 0.0
    %314 = vmatpush2.xpose.msra.mxu0 0.0
    %315 = vmatprep.subr.mxu0 0.0
    %316 = vmatpush2.xpose.msra.mxu0 0.0
    %317 = vmatprep.mubr.f32.mxu0 0.0
    %318 = vmatmul.mubr.f32.gmra.mxu0 %v248
    %v319 = vpop.f32.mrf.mxu0
    %v320 = vadd.f32 0.0, %v319
    %v321 = vpop.f32.mrf.mxu0
    %322 = vdwg.mxu0
    %v324 = vsel %vm94, %v85, 0
    %v327 = vsel %vm94, %v89, 0
    %329 = vmatprep.subr.mxu0 0.0
    %330 = vmatpush1.xpose.msra.mxu0 0.0
    %331 = vmatprep.subr.mxu0 0.0
    %332 = vmatpush1.xpose.msra.mxu0 0.0
    %333 = vmatprep.subr.mxu0 0.0
    %334 = vmatpush1.xpose.msra.mxu0 0.0
    %335 = vmatprep.subr.mxu0 0.0
    %336 = vmatpush1.xpose.msra.mxu0 0.0
    %337 = vmatprep.subr.mxu0 0.0
    %338 = vmatpush1.xpose.msra.mxu0 0.0
    %339 = vmatprep.subr.mxu0 0.0
    %340 = vmatpush1.xpose.msra.mxu0 0.0
    %341 = vmatprep.subr.mxu0 0.0
    %342 = vmatpush1.xpose.msra.mxu0 0.0
    %343 = vmatprep.subr.mxu0 0.0
    %344 = vmatpush1.xpose.msra.mxu0 0.0
    %345 = vmatprep.subr.mxu0 0.0
    %346 = vmatpush1.xpose.msra.mxu0 0.0
    %347 = vmatprep.subr.mxu0 0.0
    %348 = vmatpush1.xpose.msra.mxu0 0.0
    %349 = vmatprep.subr.mxu0 0.0
    %350 = vmatpush1.xpose.msra.mxu0 0.0
    %351 = vmatprep.subr.mxu0 0.0
    %352 = vmatpush1.xpose.msra.mxu0 0.0
    %353 = vmatprep.subr.mxu0 0.0
    %354 = vmatpush1.xpose.msra.mxu0 0.0
    %355 = vmatprep.subr.mxu0 0.0
    %356 = vmatpush1.xpose.msra.mxu0 0.0
    %357 = vmatprep.subr.mxu0 0.0
    %358 = vmatpush1.xpose.msra.mxu0 0.0
    %359 = vmatprep.subr.mxu0 0.0
    %360 = vmatpush1.xpose.msra.mxu0 %v327
    %361 = vmatprep.subr.mxu0 0.0
    %362 = vmatpush2.xpose.msra.mxu0 0.0
    %363 = vmatprep.subr.mxu0 0.0
    %364 = vmatpush2.xpose.msra.mxu0 0.0
    %365 = vmatprep.subr.mxu0 0.0
    %366 = vmatpush2.xpose.msra.mxu0 0.0
    %367 = vmatprep.subr.mxu0 0.0
    %368 = vmatpush2.xpose.msra.mxu0 0.0
    %369 = vmatprep.subr.mxu0 0.0
    %370 = vmatpush2.xpose.msra.mxu0 0.0
    %371 = vmatprep.subr.mxu0 0.0
    %372 = vmatpush2.xpose.msra.mxu0 0.0
    %373 = vmatprep.subr.mxu0 0.0
    %374 = vmatpush2.xpose.msra.mxu0 0.0
    %375 = vmatprep.subr.mxu0 0.0
    %376 = vmatpush2.xpose.msra.mxu0 0.0
    %377 = vmatprep.subr.mxu0 0.0
    %378 = vmatpush2.xpose.msra.mxu0 0.0
    %379 = vmatprep.subr.mxu0 0.0
    %380 = vmatpush2.xpose.msra.mxu0 0.0
    %381 = vmatprep.subr.mxu0 0.0
    %382 = vmatpush2.xpose.msra.mxu0 0.0
    %383 = vmatprep.subr.mxu0 0.0
    %384 = vmatpush2.xpose.msra.mxu0 0.0
    %385 = vmatprep.subr.mxu0 0.0
    %386 = vmatpush2.xpose.msra.mxu0 0.0
    %387 = vmatprep.subr.mxu0 0.0
    %388 = vmatpush2.xpose.msra.mxu0 0.0
    %389 = vmatprep.subr.mxu0 0.0
    %390 = vmatpush2.xpose.msra.mxu0 0.0
    %391 = vmatprep.subr.mxu0 0.0
    %392 = vmatpush2.xpose.msra.mxu0 0.0
    %393 = vmatprep.mubr.f32.mxu0 0.0
    %394 = vmatmul.mubr.f32.gmra.mxu0 %v324
    %v395 = vpop.f32.mrf.mxu0
    %v396 = vadd.f32 0.0, %v395
    %v397 = vpop.f32.mrf.mxu0
    %398 = vdwg.mxu0
    %v399 = vld [vmem:[#allocation8] sm:$0x3]
    %v400 = vld [vmem:[#allocation8 + $0x2] sm:$0x3]
    %v401 = vld [vmem:[#allocation8 + $0x4] sm:$0x3]
    %v402 = vld [vmem:[#allocation8 + $0x6] sm:$0x3]
    %vm403 = vnez %v399
    %vm404 = vnez %v400
    %vm405 = vnez %v401
    %vm406 = vnez %v402
    %v407 = vsel %vm403, 16843009, 0
    %v408 = vsel %vm404, 16843009, 0
    %v409 = vsel %vm405, 16843009, 0
    %v410 = vsel %vm406, 16843009, 0
    %v411 = vunpack.c.0.s8 %v407
    %v412 = vunpack.c.0.s8 %v408
    %v413 = vunpack.c.0.s8 %v409
    %v414 = vunpack.c.0.s8 %v410
    %vm415 = vcmp.ne.s32.totalorder %v411, 0
    %vm416 = vcmp.ne.s32.totalorder %v412, 0
    %vm417 = vcmp.ne.s32.totalorder %v413, 0
    %vm418 = vcmp.ne.s32.totalorder %v414, 0
    %v419 = vsel %vm415, -1e+20, %v168
    %v420 = vsel %vm416, -1e+20, %v244
    %v421 = vsel %vm417, -1e+20, %v320
    %v422 = vsel %vm418, -1e+20, %v396
    %vm423 = vcmask 64512
    %v424 = vsel %vm423, %v419, -inf
    %425 = vmax.xlane.f32.xlu0 %v424
    %v426 = vpop.xlane.xlu0 %425
    %v427 = vsel %vm423, %v420, -inf
    %428 = vmax.xlane.f32.xlu0 %v427
    %v429 = vpop.xlane.xlu0 %428
    %v430 = vsel %vm423, %v421, -inf
    %431 = vmax.xlane.f32.xlu0 %v430
    %v432 = vpop.xlane.xlu0 %431
    %v433 = vsel %vm423, %v422, -inf
    %434 = vmax.xlane.f32.xlu0 %v433
    %v435 = vpop.xlane.xlu0 %434
    %v436 = vsub.f32 %v419, %v426
    %v437 = vsub.f32 %v420, %v429
    %v438 = vsub.f32 %v421, %v432
    %v439 = vsub.f32 %v422, %v435
    %v440 = vmul.f32 %v436, 1.442695
    %v441 = vpow.pop %v440
    %v442 = vmul.f32 %v437, 1.442695
    %v443 = vpow.pop %v442
    %v444 = vmul.f32 %v438, 1.442695
    %v445 = vpow.pop %v444
    %v446 = vmul.f32 %v439, 1.442695
    %v447 = vpow.pop %v446
    %v448 = vsel %vm423, %v441, 0.0
    %449 = vadd.xlane.f32.xlu0 %v448
    %v450 = vpop.xlane.xlu0 %449
    %v451 = vsel %vm423, %v443, 0.0
    %452 = vadd.xlane.f32.xlu0 %v451
    %v453 = vpop.xlane.xlu0 %452
    %v454 = vsel %vm423, %v445, 0.0
    %455 = vadd.xlane.f32.xlu0 %v454
    %v456 = vpop.xlane.xlu0 %455
    %v457 = vsel %vm423, %v447, 0.0
    %458 = vadd.xlane.f32.xlu0 %v457
    %v459 = vpop.xlane.xlu0 %458
    %v460 = vrcp.pop %v450
    %v461 = vrcp.pop %v453
    %v462 = vrcp.pop %v456
    %v463 = vrcp.pop %v459
    %v464 = vmul.f32 %v450, %v460
    %v465 = vmul.f32 %v453, %v461
    %v466 = vmul.f32 %v456, %v462
    %v467 = vmul.f32 %v459, %v463
    %v468 = vsub.f32 2.0, %v464
    %v469 = vsub.f32 2.0, %v465
    %v470 = vsub.f32 2.0, %v466
    %v471 = vsub.f32 2.0, %v467
    %v472 = vmul.f32 %v460, %v468
    %v473 = vmul.f32 %v461, %v469
    %v474 = vmul.f32 %v462, %v470
    %v475 = vmul.f32 %v463, %v471
    %v476 = vmul.f32 %v441, %v472
    %v477 = vmul.f32 %v443, %v473
    %v478 = vmul.f32 %v445, %v474
    %v479 = vmul.f32 %v447, %v475
    %v481 = vsel %vm423, %v476, 0
    %483 = vmatprep.subr.mxu0 0.0
    %484 = vmatpush1.msra.mxu0 0.0
    %485 = vmatprep.subr.mxu0 0.0
    %486 = vmatpush1.msra.mxu0 0.0
    %487 = vmatprep.subr.mxu0 0.0
    %488 = vmatpush1.msra.mxu0 0.0
    %489 = vmatprep.subr.mxu0 0.0
    %490 = vmatpush1.msra.mxu0 0.0
    %491 = vmatprep.subr.mxu0 0.0
    %492 = vmatpush1.msra.mxu0 0.0
    %493 = vmatprep.subr.mxu0 0.0
    %494 = vmatpush1.msra.mxu0 0.0
    %495 = vmatprep.subr.mxu0 0.0
    %496 = vmatpush1.msra.mxu0 0.0
    %497 = vmatprep.subr.mxu0 0.0
    %498 = vmatpush1.msra.mxu0 0.0
    %499 = vmatprep.subr.mxu0 0.0
    %500 = vmatpush1.msra.mxu0 0.0
    %501 = vmatprep.subr.mxu0 0.0
    %502 = vmatpush1.msra.mxu0 0.0
    %503 = vmatprep.subr.mxu0 0.0
    %504 = vmatpush1.msra.mxu0 0.0
    %505 = vmatprep.subr.mxu0 0.0
    %506 = vmatpush1.msra.mxu0 0.0
    %507 = vmatprep.subr.mxu0 0.0
    %508 = vmatpush1.msra.mxu0 0.0
    %509 = vmatprep.subr.mxu0 0.0
    %510 = vmatpush1.msra.mxu0 0.0
    %511 = vmatprep.subr.mxu0 0.0
    %512 = vmatpush1.msra.mxu0 0.0
    %513 = vmatprep.subr.mxu0 0.0
    %514 = vmatpush1.msra.mxu0 %v90
    %515 = vmatprep.subr.mxu0 0.0
    %516 = vmatpush2.msra.mxu0 0.0
    %517 = vmatprep.subr.mxu0 0.0
    %518 = vmatpush2.msra.mxu0 0.0
    %519 = vmatprep.subr.mxu0 0.0
    %520 = vmatpush2.msra.mxu0 0.0
    %521 = vmatprep.subr.mxu0 0.0
    %522 = vmatpush2.msra.mxu0 0.0
    %523 = vmatprep.subr.mxu0 0.0
    %524 = vmatpush2.msra.mxu0 0.0
    %525 = vmatprep.subr.mxu0 0.0
    %526 = vmatpush2.msra.mxu0 0.0
    %527 = vmatprep.subr.mxu0 0.0
    %528 = vmatpush2.msra.mxu0 0.0
    %529 = vmatprep.subr.mxu0 0.0
    %530 = vmatpush2.msra.mxu0 0.0
    %531 = vmatprep.subr.mxu0 0.0
    %532 = vmatpush2.msra.mxu0 0.0
    %533 = vmatprep.subr.mxu0 0.0
    %534 = vmatpush2.msra.mxu0 0.0
    %535 = vmatprep.subr.mxu0 0.0
    %536 = vmatpush2.msra.mxu0 0.0
    %537 = vmatprep.subr.mxu0 0.0
    %538 = vmatpush2.msra.mxu0 0.0
    %539 = vmatprep.subr.mxu0 0.0
    %540 = vmatpush2.msra.mxu0 0.0
    %541 = vmatprep.subr.mxu0 0.0
    %542 = vmatpush2.msra.mxu0 0.0
    %543 = vmatprep.subr.mxu0 0.0
    %544 = vmatpush2.msra.mxu0 0.0
    %545 = vmatprep.subr.mxu0 0.0
    %546 = vmatpush2.msra.mxu0 0.0
    %547 = vmatprep.mubr.f32.mxu0 0.0
    %548 = vmatmul.mubr.f32.gmra.mxu0 %v481
    %v549 = vpop.f32.mrf.mxu0
    %v550 = vadd.f32 0.0, %v549
    %v551 = vpop.f32.mrf.mxu0
    %552 = vdwg.mxu0
    %v554 = vsel %vm423, %v477, 0
    %556 = vmatprep.subr.mxu0 0.0
    %557 = vmatpush1.msra.mxu0 0.0
    %558 = vmatprep.subr.mxu0 0.0
    %559 = vmatpush1.msra.mxu0 0.0
    %560 = vmatprep.subr.mxu0 0.0
    %561 = vmatpush1.msra.mxu0 0.0
    %562 = vmatprep.subr.mxu0 0.0
    %563 = vmatpush1.msra.mxu0 0.0
    %564 = vmatprep.subr.mxu0 0.0
    %565 = vmatpush1.msra.mxu0 0.0
    %566 = vmatprep.subr.mxu0 0.0
    %567 = vmatpush1.msra.mxu0 0.0
    %568 = vmatprep.subr.mxu0 0.0
    %569 = vmatpush1.msra.mxu0 0.0
    %570 = vmatprep.subr.mxu0 0.0
    %571 = vmatpush1.msra.mxu0 0.0
    %572 = vmatprep.subr.mxu0 0.0
    %573 = vmatpush1.msra.mxu0 0.0
    %574 = vmatprep.subr.mxu0 0.0
    %575 = vmatpush1.msra.mxu0 0.0
    %576 = vmatprep.subr.mxu0 0.0
    %577 = vmatpush1.msra.mxu0 0.0
    %578 = vmatprep.subr.mxu0 0.0
    %579 = vmatpush1.msra.mxu0 0.0
    %580 = vmatprep.subr.mxu0 0.0
    %581 = vmatpush1.msra.mxu0 0.0
    %582 = vmatprep.subr.mxu0 0.0
    %583 = vmatpush1.msra.mxu0 0.0
    %584 = vmatprep.subr.mxu0 0.0
    %585 = vmatpush1.msra.mxu0 0.0
    %586 = vmatprep.subr.mxu0 0.0
    %587 = vmatpush1.msra.mxu0 %v91
    %588 = vmatprep.subr.mxu0 0.0
    %589 = vmatpush2.msra.mxu0 0.0
    %590 = vmatprep.subr.mxu0 0.0
    %591 = vmatpush2.msra.mxu0 0.0
    %592 = vmatprep.subr.mxu0 0.0
    %593 = vmatpush2.msra.mxu0 0.0
    %594 = vmatprep.subr.mxu0 0.0
    %595 = vmatpush2.msra.mxu0 0.0
    %596 = vmatprep.subr.mxu0 0.0
    %597 = vmatpush2.msra.mxu0 0.0
    %598 = vmatprep.subr.mxu0 0.0
    %599 = vmatpush2.msra.mxu0 0.0
    %600 = vmatprep.subr.mxu0 0.0
    %601 = vmatpush2.msra.mxu0 0.0
    %602 = vmatprep.subr.mxu0 0.0
    %603 = vmatpush2.msra.mxu0 0.0
    %604 = vmatprep.subr.mxu0 0.0
    %605 = vmatpush2.msra.mxu0 0.0
    %606 = vmatprep.subr.mxu0 0.0
    %607 = vmatpush2.msra.mxu0 0.0
    %608 = vmatprep.subr.mxu0 0.0
    %609 = vmatpush2.msra.mxu0 0.0
    %610 = vmatprep.subr.mxu0 0.0
    %611 = vmatpush2.msra.mxu0 0.0
    %612 = vmatprep.subr.mxu0 0.0
    %613 = vmatpush2.msra.mxu0 0.0
    %614 = vmatprep.subr.mxu0 0.0
    %615 = vmatpush2.msra.mxu0 0.0
    %616 = vmatprep.subr.mxu0 0.0
    %617 = vmatpush2.msra.mxu0 0.0
    %618 = vmatprep.subr.mxu0 0.0
    %619 = vmatpush2.msra.mxu0 0.0
    %620 = vmatprep.mubr.f32.mxu0 0.0
    %621 = vmatmul.mubr.f32.gmra.mxu0 %v554
    %v622 = vpop.f32.mrf.mxu0
    %v623 = vadd.f32 0.0, %v622
    %v624 = vpop.f32.mrf.mxu0
    %625 = vdwg.mxu0
    %v627 = vsel %vm423, %v478, 0
    %629 = vmatprep.subr.mxu0 0.0
    %630 = vmatpush1.msra.mxu0 0.0
    %631 = vmatprep.subr.mxu0 0.0
    %632 = vmatpush1.msra.mxu0 0.0
    %633 = vmatprep.subr.mxu0 0.0
    %634 = vmatpush1.msra.mxu0 0.0
    %635 = vmatprep.subr.mxu0 0.0
    %636 = vmatpush1.msra.mxu0 0.0
    %637 = vmatprep.subr.mxu0 0.0
    %638 = vmatpush1.msra.mxu0 0.0
    %639 = vmatprep.subr.mxu0 0.0
    %640 = vmatpush1.msra.mxu0 0.0
    %641 = vmatprep.subr.mxu0 0.0
    %642 = vmatpush1.msra.mxu0 0.0
    %643 = vmatprep.subr.mxu0 0.0
    %644 = vmatpush1.msra.mxu0 0.0
    %645 = vmatprep.subr.mxu0 0.0
    %646 = vmatpush1.msra.mxu0 0.0
    %647 = vmatprep.subr.mxu0 0.0
    %648 = vmatpush1.msra.mxu0 0.0
    %649 = vmatprep.subr.mxu0 0.0
    %650 = vmatpush1.msra.mxu0 0.0
    %651 = vmatprep.subr.mxu0 0.0
    %652 = vmatpush1.msra.mxu0 0.0
    %653 = vmatprep.subr.mxu0 0.0
    %654 = vmatpush1.msra.mxu0 0.0
    %655 = vmatprep.subr.mxu0 0.0
    %656 = vmatpush1.msra.mxu0 0.0
    %657 = vmatprep.subr.mxu0 0.0
    %658 = vmatpush1.msra.mxu0 0.0
    %659 = vmatprep.subr.mxu0 0.0
    %660 = vmatpush1.msra.mxu0 %v92
    %661 = vmatprep.subr.mxu0 0.0
    %662 = vmatpush2.msra.mxu0 0.0
    %663 = vmatprep.subr.mxu0 0.0
    %664 = vmatpush2.msra.mxu0 0.0
    %665 = vmatprep.subr.mxu0 0.0
    %666 = vmatpush2.msra.mxu0 0.0
    %667 = vmatprep.subr.mxu0 0.0
    %668 = vmatpush2.msra.mxu0 0.0
    %669 = vmatprep.subr.mxu0 0.0
    %670 = vmatpush2.msra.mxu0 0.0
    %671 = vmatprep.subr.mxu0 0.0
    %672 = vmatpush2.msra.mxu0 0.0
    %673 = vmatprep.subr.mxu0 0.0
    %674 = vmatpush2.msra.mxu0 0.0
    %675 = vmatprep.subr.mxu0 0.0
    %676 = vmatpush2.msra.mxu0 0.0
    %677 = vmatprep.subr.mxu0 0.0
    %678 = vmatpush2.msra.mxu0 0.0
    %679 = vmatprep.subr.mxu0 0.0
    %680 = vmatpush2.msra.mxu0 0.0
    %681 = vmatprep.subr.mxu0 0.0
    %682 = vmatpush2.msra.mxu0 0.0
    %683 = vmatprep.subr.mxu0 0.0
    %684 = vmatpush2.msra.mxu0 0.0
    %685 = vmatprep.subr.mxu0 0.0
    %686 = vmatpush2.msra.mxu0 0.0
    %687 = vmatprep.subr.mxu0 0.0
    %688 = vmatpush2.msra.mxu0 0.0
    %689 = vmatprep.subr.mxu0 0.0
    %690 = vmatpush2.msra.mxu0 0.0
    %691 = vmatprep.subr.mxu0 0.0
    %692 = vmatpush2.msra.mxu0 0.0
    %693 = vmatprep.mubr.f32.mxu0 0.0
    %694 = vmatmul.mubr.f32.gmra.mxu0 %v627
    %v695 = vpop.f32.mrf.mxu0
    %v696 = vadd.f32 0.0, %v695
    %v697 = vpop.f32.mrf.mxu0
    %698 = vdwg.mxu0
    %v700 = vsel %vm423, %v479, 0
    %702 = vmatprep.subr.mxu0 0.0
    %703 = vmatpush1.msra.mxu0 0.0
    %704 = vmatprep.subr.mxu0 0.0
    %705 = vmatpush1.msra.mxu0 0.0
    %706 = vmatprep.subr.mxu0 0.0
    %707 = vmatpush1.msra.mxu0 0.0
    %708 = vmatprep.subr.mxu0 0.0
    %709 = vmatpush1.msra.mxu0 0.0
    %710 = vmatprep.subr.mxu0 0.0
    %711 = vmatpush1.msra.mxu0 0.0
    %712 = vmatprep.subr.mxu0 0.0
    %713 = vmatpush1.msra.mxu0 0.0
    %714 = vmatprep.subr.mxu0 0.0
    %715 = vmatpush1.msra.mxu0 0.0
    %716 = vmatprep.subr.mxu0 0.0
    %717 = vmatpush1.msra.mxu0 0.0
    %718 = vmatprep.subr.mxu0 0.0
    %719 = vmatpush1.msra.mxu0 0.0
    %720 = vmatprep.subr.mxu0 0.0
    %721 = vmatpush1.msra.mxu0 0.0
    %722 = vmatprep.subr.mxu0 0.0
    %723 = vmatpush1.msra.mxu0 0.0
    %724 = vmatprep.subr.mxu0 0.0
    %725 = vmatpush1.msra.mxu0 0.0
    %726 = vmatprep.subr.mxu0 0.0
    %727 = vmatpush1.msra.mxu0 0.0
    %728 = vmatprep.subr.mxu0 0.0
    %729 = vmatpush1.msra.mxu0 0.0
    %730 = vmatprep.subr.mxu0 0.0
    %731 = vmatpush1.msra.mxu0 0.0
    %732 = vmatprep.subr.mxu0 0.0
    %733 = vmatpush1.msra.mxu0 %v93
    %734 = vmatprep.subr.mxu0 0.0
    %735 = vmatpush2.msra.mxu0 0.0
    %736 = vmatprep.subr.mxu0 0.0
    %737 = vmatpush2.msra.mxu0 0.0
    %738 = vmatprep.subr.mxu0 0.0
    %739 = vmatpush2.msra.mxu0 0.0
    %740 = vmatprep.subr.mxu0 0.0
    %741 = vmatpush2.msra.mxu0 0.0
    %742 = vmatprep.subr.mxu0 0.0
    %743 = vmatpush2.msra.mxu0 0.0
    %744 = vmatprep.subr.mxu0 0.0
    %745 = vmatpush2.msra.mxu0 0.0
    %746 = vmatprep.subr.mxu0 0.0
    %747 = vmatpush2.msra.mxu0 0.0
    %748 = vmatprep.subr.mxu0 0.0
    %749 = vmatpush2.msra.mxu0 0.0
    %750 = vmatprep.subr.mxu0 0.0
    %751 = vmatpush2.msra.mxu0 0.0
    %752 = vmatprep.subr.mxu0 0.0
    %753 = vmatpush2.msra.mxu0 0.0
    %754 = vmatprep.subr.mxu0 0.0
    %755 = vmatpush2.msra.mxu0 0.0
    %756 = vmatprep.subr.mxu0 0.0
    %757 = vmatpush2.msra.mxu0 0.0
    %758 = vmatprep.subr.mxu0 0.0
    %759 = vmatpush2.msra.mxu0 0.0
    %760 = vmatprep.subr.mxu0 0.0
    %761 = vmatpush2.msra.mxu0 0.0
    %762 = vmatprep.subr.mxu0 0.0
    %763 = vmatpush2.msra.mxu0 0.0
    %764 = vmatprep.subr.mxu0 0.0
    %765 = vmatpush2.msra.mxu0 0.0
    %766 = vmatprep.mubr.f32.mxu0 0.0
    %767 = vmatmul.mubr.f32.gmra.mxu0 %v700
    %v768 = vpop.f32.mrf.mxu0
    %v769 = vadd.f32 0.0, %v768
    %v770 = vpop.f32.mrf.mxu0
    %771 = vdwg.mxu0
    %772 = vst.msk [vmem:[#allocation10] sm:$0xff] %vm94, %v550
    %773 = vst.msk [vmem:[#allocation10 + $0x8] sm:$0xff] %vm94, %v623
    %774 = vst.msk [vmem:[#allocation10 + $0x10] sm:$0xff] %vm94, %v696
    %775 = vst.msk [vmem:[#allocation10 + $0x18] sm:$0xff] %vm94, %v769
    %776 = vst.msk [vmem:[#allocation11] sm:$0xff] %vm423, %v476
    %777 = vst.msk [vmem:[#allocation11 + $0x8] sm:$0xff] %vm423, %v477
    %778 = vst.msk [vmem:[#allocation11 + $0x10] sm:$0xff] %vm423, %v478
    %779 = vst.msk [vmem:[#allocation11 + $0x18] sm:$0xff] %vm423, %v479
    // Predicated region
    $region34: #{tpu_custom_call.1} parent=1 // pred_check
      _
    $region35: #{tpu_custom_call.1} parent=1 // pred_check_branch
      %781 = sbr.rel (0) target = $region37
    $region36: #{tpu_custom_call.1} parent=1 // pred_region
      %s783 = ssub.s32 512, 512
      %784 = vsyncadd [#allocation4], %s783
      %s785 = sshll.u32 [#allocation10], 4
      %s786 = int_to_ptr.vmem [resolvable:$true] %s785
      %791 = dma.vmem_to_hbm [thread:$0]  %s786, 512, %s4, [#allocation4], 128, 128, 8
    $region37: #{tpu_custom_call.1} parent=1 // pred_fallthru
      _
    // Predicated region
    $region38: #{tpu_custom_call.1} parent=1 // pred_check
      _
    $region39: #{tpu_custom_call.1} parent=1 // pred_check_branch
      %793 = sbr.rel (0) target = $region41
    $region40: #{tpu_custom_call.1} parent=1 // pred_region
      %s795 = ssub.s32 512, 512
      %796 = vsyncadd [#allocation12], %s795
      %s797 = sshll.u32 [#allocation11], 4
      %s798 = int_to_ptr.vmem [resolvable:$true] %s797
      %803 = dma.vmem_to_hbm [thread:$0]  %s798, 512, %s5, [#allocation12], 128, 128, 8
    $region41: #{tpu_custom_call.1} parent=1 // pred_fallthru
      _
    // Predicated region
    $region42: #{tpu_custom_call.1} parent=1 // pred_check
      _
    $region43: #{tpu_custom_call.1} parent=1 // pred_check_branch
      %805 = sbr.rel (0) target = $region45
    $region44: #{tpu_custom_call.1} parent=1 // pred_region
      %806 = dma.done [#allocation4], 512
    $region45: #{tpu_custom_call.1} parent=1 // pred_fallthru
      _
    // Predicated region
    $region46: #{tpu_custom_call.1} parent=1 // pred_check
      _
    $region47: #{tpu_custom_call.1} parent=1 // pred_check_branch
      %808 = sbr.rel (0) target = $region49
    $region48: #{tpu_custom_call.1} parent=1 // pred_region
      %809 = dma.done [#allocation12], 512
    $region49: #{tpu_custom_call.1} parent=1 // pred_fallthru
      _
    %810 = vsyncpa [#allocation3], 1
    %811 = vsyncpa [#allocation6], 1
    %812 = vsyncpa [#allocation9], 1
    %813 = vsyncpa [#allocation4], 1
    %814 = vsyncpa [#allocation12], 1

</llo_original>
